<compile_context>
chip_gen: v5e
topology: v5e:2x2
jax: 0.10.0
libtpu: 0.0.40
codegen_flags: <defaults>
</compile_context>

<pallas_src>
import functools
import math

import jax
import jax.numpy as jnp
from jax.experimental import pallas as pl
from jax.experimental.pallas import tpu as pltpu


# ---------------------------------------------------------------------------
# Kernel
# ---------------------------------------------------------------------------
def _basic_block_kernel(x_ref, w1_ref, b1_ref, w2_ref, b2_ref, o_ref, *,
                        NB, H, WC):
    """NB batch elements per grid step; all tensors lane-dense.

    x_ref  : (NB, H, W*Cin)   f32   input slab
    w1_ref : (3*W*Cin, W*C)   bf16  banded conv1 weights, ky-stacked along K
    b1_ref : (1, W*C)         f32   conv1 bias tiled across W
    w2_ref : (3*W*C, W*C)     bf16  banded conv2 weights, ky-stacked along K
    b2_ref : (1, W*C)         f32   conv2 bias tiled across W
    o_ref  : (NB, H, W*C)           output slab
    """
    f32 = jnp.float32
    M = NB * H

    # Merge (NB, H) -> M rows: contiguous / lane-aligned, free view.
    x2d = x_ref[...].reshape(M, WC).astype(f32)

    # Local row index inside each batch element -> boundary masks for the ky
    # shifts (also prevents rows of one batch element leaking into the next
    # across the merged M axis).
    row = jax.lax.broadcasted_iota(jnp.int32, (NB, H, WC), 1).reshape(M, WC)

    def conv3x3(inp_f32, w_ref, b_ref):
        # out[y] = bias + [x[y-1] | x[y] | x[y+1]] @ [Wk0; Wk1; Wk2]
        # Row shifts via sublane roll (XLU) + masks; single K=3*WC MXU dot.
        up = jnp.where(row >= 1, pltpu.roll(inp_f32, shift=1, axis=0), 0.0)
        dn = jnp.where(row <= H - 2,
                       pltpu.roll(inp_f32, shift=M - 1, axis=0), 0.0)
        lhs = jnp.concatenate([up, inp_f32, dn], axis=-1).astype(jnp.bfloat16)
        return b_ref[...].astype(f32) + jnp.dot(
            lhs, w_ref[...], preferred_element_type=f32)

    mid = jnp.maximum(conv3x3(x2d, w1_ref, b1_ref), 0.0)    # relu(conv1(x))
    out = conv3x3(mid, w2_ref, b2_ref) + x2d                 # conv2 + residual
    o_ref[...] = jnp.maximum(out, 0.0).reshape(NB, H, WC).astype(o_ref.dtype)


# ---------------------------------------------------------------------------
# One-time parameter preparation (call at load time, NOT per forward)
# ---------------------------------------------------------------------------
def _banded_weights(w_hwio, W, dtype):
    """Fold the 3x3 conv's kx taps into block-banded matrices and stack the
    three ky bands along K: (3, 3, Cin, Cout) -> (3*W*Cin, W*Cout) with

        Wk[ky][(wo + kx - 1)*Cin + ci, wo*Cout + co] = w[ky, kx, ci, co]

    so [x[y-1] | x[y] | x[y+1]] @ Wk performs the whole 3x3 tap sweep for one
    output row (left/right column padding handled inside each band)."""
    _, _, Cin, Cout = w_hwio.shape
    idx = jnp.arange(W)
    bands = []
    for ky in range(3):
        acc = jnp.zeros((W * Cin, W * Cout), jnp.float32)
        for kx in range(3):
            sel = (idx[:, None] == (idx[None, :] + (kx - 1))).astype(jnp.float32)
            acc = acc + jnp.einsum(
                "ab,cd->acbd", sel, w_hwio[ky, kx].astype(jnp.float32)
            ).reshape(W * Cin, W * Cout)
        bands.append(acc)
    return jnp.concatenate(bands, axis=0).astype(dtype)


def prepare_basic_block_params(w1, b1, w2, b2, W, *, weights_layout="OIHW",
                               mxu_dtype=jnp.bfloat16):
    """Build banded, ky-stacked, bf16 weights and W-tiled f32 bias rows once."""
    if weights_layout == "OIHW":            # PyTorch nn.Conv2d native layout
        w1 = jnp.transpose(w1, (2, 3, 1, 0))
        w2 = jnp.transpose(w2, (2, 3, 1, 0))
    elif weights_layout != "HWIO":
        raise ValueError(f"unknown weights_layout: {weights_layout}")
    wk1 = _banded_weights(w1, W, mxu_dtype)
    wk2 = _banded_weights(w2, W, mxu_dtype)
    b1_row = jnp.tile(b1.astype(jnp.float32), W).reshape(1, -1)
    b2_row = jnp.tile(b2.astype(jnp.float32), W).reshape(1, -1)
    return wk1, b1_row, wk2, b2_row


# ---------------------------------------------------------------------------
# Forward
# ---------------------------------------------------------------------------
def _const_block_spec(shape, index_map):
    """Grid-invariant operand: request single buffering when the running JAX
    supports BlockSpec.pipeline_mode (saves one pipeline buffer of VMEM)."""
    if hasattr(pl, "Buffered"):
        try:
            return pl.BlockSpec(shape, index_map, pipeline_mode=pl.Buffered(1))
        except TypeError:      # older JAX without the pipeline_mode kwarg
            pass
    return pl.BlockSpec(shape, index_map)


def _pick_batch_block(N, H):
    """Rows per MXU matmul = NB*H.  Aim for M >= 128, but keep >= 2 grid
    steps when N >= 2 so both v7x TensorCores get a step (v5e/v6e have a
    single TC, where one big step would also be fine)."""
    nb = min(max(1, -(-128 // H)), N)
    if N >= 2 and -(-N // nb) < 2:
        nb = max(1, N // 2)
    while N % nb:
        nb -= 1
    return nb


@jax.jit
def basic_block_forward(x_nhwc, wk1, b1_row, wk2, b2_row):
    """x_nhwc: (N, H, W, C); params from prepare_basic_block_params."""
    N, H, W, Cin = x_nhwc.shape
    WC = b1_row.shape[-1]
    Cout = WC // W
    assert Cin == Cout, "identity residual requires in_planes == planes"
    assert wk1.shape == (3 * W * Cin, WC) and wk2.shape == (3 * WC, WC)
    # Lane-dense requirement for unmasked stores / free in-kernel reshapes.
    # TODO(synk): pad W*C up to a multiple of 128 for shapes that need it.
    assert WC % 128 == 0 and H % 8 == 0, (WC, H)
    # TODO(synk): stride>1 / downsample path not implemented (forward with
    # downsample=None implies stride=1 and in_planes == planes).
    # TODO(synk): for production PIXOR shapes (H,W in the hundreds, C~96),
    # replace the (W*Cin, W*Cout) banded weights with row-strip tiling plus a
    # 2-row halo (im2col per strip); size strips per generation (v7x 64 MiB
    # physical VMEM vs 128 MiB on v5e/v6e) and set vmem_limit_bytes.

    NB = _pick_batch_block(N, H)
    grid = (N // NB,)

    x_slab = x_nhwc.reshape(N, H, W * Cin)        # row-major: free view

    kernel = functools.partial(_basic_block_kernel, NB=NB, H=H, WC=WC)

    flops = 2 * 2 * (N * H) * (3 * WC) * WC       # two convs, one matmul each
    bytes_accessed = (2 * N * H * WC * 4          # x in + out (f32)
                      + (wk1.size + wk2.size) * 2  # bf16 banded weights
                      + 2 * WC * 4)               # biases

    out_slab = pl.pallas_call(
        kernel,
        out_shape=jax.ShapeDtypeStruct((N, H, WC), x_nhwc.dtype),
        grid_spec=pltpu.PrefetchScalarGridSpec(
            num_scalar_prefetch=0,
            grid=grid,                            # NB batch elements per step
            in_specs=[
                pl.BlockSpec((NB, H, W * Cin), lambda n: (n, 0, 0)),
                _const_block_spec((3 * W * Cin, WC), lambda n: (0, 0)),
                _const_block_spec((1, WC), lambda n: (0, 0)),
                _const_block_spec((3 * WC, WC), lambda n: (0, 0)),
                _const_block_spec((1, WC), lambda n: (0, 0)),
            ],
            out_specs=pl.BlockSpec((NB, H, WC), lambda n: (n, 0, 0)),
        ),
        compiler_params=pltpu.CompilerParams(
            dimension_semantics=("parallel",)),   # both v7x TCs when grid >= 2
        cost_estimate=pl.CostEstimate(
            flops=flops, transcendentals=0, bytes_accessed=bytes_accessed),
    )(x_slab, wk1, b1_row, wk2, b2_row)

    return out_slab.reshape(N, H, W, Cout)


# ---------------------------------------------------------------------------
# Pure-JAX reference (NHWC lax convs) for correctness check
# ---------------------------------------------------------------------------
def _reference_nhwc(x, w1_hwio, b1, w2_hwio, b2):
    dn = ("NHWC", "HWIO", "NHWC")
    hi = jax.lax.Precision.HIGHEST
    out = jax.lax.conv_general_dilated(
        x, w1_hwio, (1, 1), ((1, 1), (1, 1)), dimension_numbers=dn,
        precision=hi)
    out = jnp.maximum(out + b1, 0.0)
    out = jax.lax.conv_general_dilated(
        out, w2_hwio, (1, 1), ((1, 1), (1, 1)), dimension_numbers=dn,
        precision=hi)
    return jnp.maximum(out + b2 + x, 0.0)


if __name__ == "__main__":
    # Small shapes consistent with the module: N=2, in_planes=planes=8, 16x16.
    # Activations stay NHWC / lane-dense end-to-end (no NCHW transposes);
    # W * C = 16 * 8 = 128 makes the slabs exactly lane-dense.
    N, Hs, Ws, C = 2, 16, 16, 8

    key = jax.random.PRNGKey(0)
    k_x, k_w1, k_b1, k_w2, k_b2 = jax.random.split(key, 5)

    x = jax.random.normal(k_x, (N, Hs, Ws, C), dtype=jnp.float32)

    # Deterministic params in PyTorch's native OIHW layout
    # (kaiming-uniform-ish bounds, like nn.Conv2d defaults).
    fan_in = C * 3 * 3
    bound = 1.0 / math.sqrt(fan_in)
    w1 = jax.random.uniform(k_w1, (C, C, 3, 3), jnp.float32, -bound, bound)
    b1 = jax.random.uniform(k_b1, (C,), jnp.float32, -bound, bound)
    w2 = jax.random.uniform(k_w2, (C, C, 3, 3), jnp.float32, -bound, bound)
    b2 = jax.random.uniform(k_b2, (C,), jnp.float32, -bound, bound)

    # One-time parameter prep (banded bf16 weights, tiled biases).
    params = prepare_basic_block_params(w1, b1, w2, b2, Ws,
                                        weights_layout="OIHW")

    out = jax.block_until_ready(basic_block_forward(x, *params))

    w1_hwio = jnp.transpose(w1, (2, 3, 1, 0))
    w2_hwio = jnp.transpose(w2, (2, 3, 1, 0))
    ref = jax.block_until_ready(_reference_nhwc(x, w1_hwio, b1, w2_hwio, b2))

    assert out.shape == (N, Hs, Ws, C), out.shape
    # bf16 MXU operands with f32 accumulation -> loosened tolerance vs f32 ref.
    assert jnp.allclose(out, ref, atol=5e-2, rtol=5e-2), float(
        jnp.max(jnp.abs(out - ref)))

    print("KERNEL_OK")
</pallas_src>

<mosaic_0001>
module attributes {stable_mosaic.version = 11 : i64} {
  func.func @_basic_block_kernel(%arg0: i32, %arg1: memref<1x16x128xf32, #tpu.memory_space<vmem>>, %arg2: memref<384x128xbf16, #tpu.memory_space<vmem>>, %arg3: memref<1x128xf32, #tpu.memory_space<vmem>>, %arg4: memref<384x128xbf16, #tpu.memory_space<vmem>>, %arg5: memref<1x128xf32, #tpu.memory_space<vmem>>, %arg6: memref<1x16x128xf32, #tpu.memory_space<vmem>>) attributes {dimension_semantics = [#tpu.dimension_semantics<parallel>], iteration_bounds = array<i64: 2>, scalar_prefetch = 0 : i64, scratch_operands = 0 : i64, tpu.core_type = #tpu.core_type<tc>, window_params = [{transform_indices = @transform_0, window_bounds = array<i64: 1, 16, 128>}, {pipeline_mode = #tpu.pipeline_mode<synchronous>, transform_indices = @transform_1, window_bounds = array<i64: 384, 128>}, {pipeline_mode = #tpu.pipeline_mode<synchronous>, transform_indices = @transform_2, window_bounds = array<i64: 1, 128>}, {pipeline_mode = #tpu.pipeline_mode<synchronous>, transform_indices = @transform_3, window_bounds = array<i64: 384, 128>}, {pipeline_mode = #tpu.pipeline_mode<synchronous>, transform_indices = @transform_4, window_bounds = array<i64: 1, 128>}, {transform_indices = @transform_5, window_bounds = array<i64: 1, 16, 128>}]} {
    %c0 = arith.constant 0 : index
    %c0_0 = arith.constant 0 : index
    %c0_1 = arith.constant 0 : index
    %0 = vector.load %arg1[%c0, %c0_0, %c0_1] : memref<1x16x128xf32, #tpu.memory_space<vmem>>, vector<1x16x128xf32>
    %1 = vector.shape_cast %0 : vector<1x16x128xf32> to vector<16x128xf32>
    %2 = tpu.iota {dimensions = array<i32: 1>} : vector<1x16x128xi32>
    %3 = vector.shape_cast %2 : vector<1x16x128xi32> to vector<16x128xi32>
    %c1_i32 = arith.constant 1 : i32
    %4 = vector.broadcast %c1_i32 : i32 to vector<16x128xi32>
    %5 = arith.cmpi sge, %3, %4 : vector<16x128xi32>
    %c1_i32_2 = arith.constant 1 : i32
    %6 = tpu.dynamic_rotate %1 by %c1_i32_2 dim 0 : vector<16x128xf32>, i32 -> vector<16x128xf32>
    %cst = arith.constant 0.000000e+00 : f32
    %7 = vector.broadcast %cst : f32 to vector<16x128xf32>
    %8 = arith.select %5, %6, %7 : vector<16x128xi1>, vector<16x128xf32>
    %c14_i32 = arith.constant 14 : i32
    %9 = vector.broadcast %c14_i32 : i32 to vector<16x128xi32>
    %10 = arith.cmpi sle, %3, %9 : vector<16x128xi32>
    %c15_i32 = arith.constant 15 : i32
    %11 = tpu.dynamic_rotate %1 by %c15_i32 dim 0 : vector<16x128xf32>, i32 -> vector<16x128xf32>
    %cst_3 = arith.constant 0.000000e+00 : f32
    %12 = vector.broadcast %cst_3 : f32 to vector<16x128xf32>
    %13 = arith.select %10, %11, %12 : vector<16x128xi1>, vector<16x128xf32>
    %14 = tpu.concatenate %8, %1, %13 in 1 : vector<16x128xf32>, vector<16x128xf32>, vector<16x128xf32> -> vector<16x384xf32>
    %15 = arith.truncf %14 : vector<16x384xf32> to vector<16x384xbf16>
    %c0_4 = arith.constant 0 : index
    %c0_5 = arith.constant 0 : index
    %16 = vector.load %arg3[%c0_4, %c0_5] : memref<1x128xf32, #tpu.memory_space<vmem>>, vector<1x128xf32>
    %c0_6 = arith.constant 0 : index
    %c0_7 = arith.constant 0 : index
    %17 = vector.load %arg2[%c0_6, %c0_7] : memref<384x128xbf16, #tpu.memory_space<vmem>>, vector<384x128xbf16>
    %cst_8 = arith.constant dense<0.000000e+00> : vector<16x128xf32>
    %18 = tpu.matmul %15, %17, %cst_8 {dimension_numbers = #tpu.dot_dimension_numbers<[1], [0], [0], [1], [0, 0, 1, 1], [], []>} : vector<16x384xbf16>, vector<384x128xbf16>, vector<16x128xf32> -> vector<16x128xf32>
    %19 = vector.broadcast %16 : vector<1x128xf32> to vector<16x128xf32>
    %20 = arith.addf %19, %18 : vector<16x128xf32>
    %cst_9 = arith.constant 0.000000e+00 : f32
    %21 = vector.broadcast %cst_9 : f32 to vector<16x128xf32>
    %22 = arith.maximumf %20, %21 : vector<16x128xf32>
    %c1_i32_10 = arith.constant 1 : i32
    %23 = vector.broadcast %c1_i32_10 : i32 to vector<16x128xi32>
    %24 = arith.cmpi sge, %3, %23 : vector<16x128xi32>
    %c1_i32_11 = arith.constant 1 : i32
    %25 = tpu.dynamic_rotate %22 by %c1_i32_11 dim 0 : vector<16x128xf32>, i32 -> vector<16x128xf32>
    %cst_12 = arith.constant 0.000000e+00 : f32
    %26 = vector.broadcast %cst_12 : f32 to vector<16x128xf32>
    %27 = arith.select %24, %25, %26 : vector<16x128xi1>, vector<16x128xf32>
    %c14_i32_13 = arith.constant 14 : i32
    %28 = vector.broadcast %c14_i32_13 : i32 to vector<16x128xi32>
    %29 = arith.cmpi sle, %3, %28 : vector<16x128xi32>
    %c15_i32_14 = arith.constant 15 : i32
    %30 = tpu.dynamic_rotate %22 by %c15_i32_14 dim 0 : vector<16x128xf32>, i32 -> vector<16x128xf32>
    %cst_15 = arith.constant 0.000000e+00 : f32
    %31 = vector.broadcast %cst_15 : f32 to vector<16x128xf32>
    %32 = arith.select %29, %30, %31 : vector<16x128xi1>, vector<16x128xf32>
    %33 = tpu.concatenate %27, %22, %32 in 1 : vector<16x128xf32>, vector<16x128xf32>, vector<16x128xf32> -> vector<16x384xf32>
    %34 = arith.truncf %33 : vector<16x384xf32> to vector<16x384xbf16>
    %c0_16 = arith.constant 0 : index
    %c0_17 = arith.constant 0 : index
    %35 = vector.load %arg5[%c0_16, %c0_17] : memref<1x128xf32, #tpu.memory_space<vmem>>, vector<1x128xf32>
    %c0_18 = arith.constant 0 : index
    %c0_19 = arith.constant 0 : index
    %36 = vector.load %arg4[%c0_18, %c0_19] : memref<384x128xbf16, #tpu.memory_space<vmem>>, vector<384x128xbf16>
    %cst_20 = arith.constant dense<0.000000e+00> : vector<16x128xf32>
    %37 = tpu.matmul %34, %36, %cst_20 {dimension_numbers = #tpu.dot_dimension_numbers<[1], [0], [0], [1], [0, 0, 1, 1], [], []>} : vector<16x384xbf16>, vector<384x128xbf16>, vector<16x128xf32> -> vector<16x128xf32>
    %38 = vector.broadcast %35 : vector<1x128xf32> to vector<16x128xf32>
    %39 = arith.addf %38, %37 : vector<16x128xf32>
    %40 = arith.addf %39, %1 : vector<16x128xf32>
    %cst_21 = arith.constant 0.000000e+00 : f32
    %41 = vector.broadcast %cst_21 : f32 to vector<16x128xf32>
    %42 = arith.maximumf %40, %41 : vector<16x128xf32>
    %43 = vector.shape_cast %42 : vector<16x128xf32> to vector<1x16x128xf32>
    %c0_22 = arith.constant 0 : index
    %c0_23 = arith.constant 0 : index
    %c0_24 = arith.constant 0 : index
    %44 = vector.load %arg6[%c0_22, %c0_23, %c0_24] : memref<1x16x128xf32, #tpu.memory_space<vmem>>, vector<1x16x128xf32>
    tpu.vector_store %arg6[%c0_22, %c0_23, %c0_24], %43 {strides = array<i32>} : memref<1x16x128xf32, #tpu.memory_space<vmem>>, vector<1x16x128xf32>,
    return
  }
  func.func @transform_0(%arg0: i32) -> (i32, i32, i32) {
    %c0_i32 = arith.constant 0 : i32
    %c0_i32_0 = arith.constant 0 : i32
    %c0_i32_1 = arith.constant 0 : i32
    return %arg0, %c0_i32, %c0_i32_0 : i32, i32, i32
  }
  func.func @transform_1(%arg0: i32) -> (i32, i32) {
    %c0_i32 = arith.constant 0 : i32
    %c0_i32_0 = arith.constant 0 : i32
    %c0_i32_1 = arith.constant 0 : i32
    return %c0_i32, %c0_i32_0 : i32, i32
  }
  func.func @transform_2(%arg0: i32) -> (i32, i32) {
    %c0_i32 = arith.constant 0 : i32
    %c0_i32_0 = arith.constant 0 : i32
    %c0_i32_1 = arith.constant 0 : i32
    return %c0_i32, %c0_i32_0 : i32, i32
  }
  func.func @transform_3(%arg0: i32) -> (i32, i32) {
    %c0_i32 = arith.constant 0 : i32
    %c0_i32_0 = arith.constant 0 : i32
    %c0_i32_1 = arith.constant 0 : i32
    return %c0_i32, %c0_i32_0 : i32, i32
  }
  func.func @transform_4(%arg0: i32) -> (i32, i32) {
    %c0_i32 = arith.constant 0 : i32
    %c0_i32_0 = arith.constant 0 : i32
    %c0_i32_1 = arith.constant 0 : i32
    return %c0_i32, %c0_i32_0 : i32, i32
  }
  func.func @transform_5(%arg0: i32) -> (i32, i32, i32) {
    %c0_i32 = arith.constant 0 : i32
    %c0_i32_0 = arith.constant 0 : i32
    %c0_i32_1 = arith.constant 0 : i32
    return %arg0, %c0_i32, %c0_i32_0 : i32, i32, i32
  }
}

</mosaic_0001>

<llo_original>
// kernel: basic_block_forward.1
$region0: #{basic_block_forward.1}
  #allocation0 [shape = 'u32[]', space=smem, size = 0x4, offset = 0x4, fixed_abs, tag = 'smem constant byte address 0x4 - core index']
  #allocation1 [shape = 'u32[72,128]{1,0:T(1,128)}', space=vmem, size = 0x9000, scoped, tag = 'internal scratch']
  %s0 = inlined_call_operand.vmem [shape: f32[2,16,128], index: 0, kind: input, shape index: {}]
  %s1 = inlined_call_operand.vmem [shape: bf16[384,128], index: 1, kind: input, shape index: {}]
  %s2 = inlined_call_operand.vmem [shape: f32[1,128], index: 2, kind: input, shape index: {}]
  %s3 = inlined_call_operand.vmem [shape: bf16[384,128], index: 3, kind: input, shape index: {}]
  %s4 = inlined_call_operand.vmem [shape: f32[1,128], index: 4, kind: input, shape index: {}]
  %s5 = inlined_call_operand.vmem [shape: f32[2,16,128], index: 5, kind: output, shape index: {}]
  %s6 = sld [smem:[#allocation0]]
  $region53: #{basic_block_forward.1} parent=0
    _
  %s8 = ssub.s32 1, %s6
  %s9 = scalar_select 0, %s8, %s6
  loop: start=0, step=1, limit=4
  $region2: #{basic_block_forward.1} parent=0 // loop_pre_header
    _
  $region3: #{basic_block_forward.1} parent=0 // loop_header
    %s11 = sphi 0, %s15
    %p12 = scmp.ge.s32.totalorder %s11, 4
    %s21 = sphi 0, %s23
    %s24 = sphi 0, %s21
    %s25 = sphi 0, %s24
    %s41 = sphi 0, %s25
    %s45 = sphi 0, %s45
    %s47 = sphi 0, %s45
    %s48 = sphi 0, %s47
    %s62 = sphi 0, %s48
    %s66 = sphi 0, %s66
    %s68 = sphi 0, %s66
    %s69 = sphi 0, %s68
    %s83 = sphi 0, %s69
    %s87 = sphi 0, %s87
    %s89 = sphi 0, %s87
    %s90 = sphi 0, %s89
    %s104 = sphi 0, %s90
    %s108 = sphi 0, %s108
    %s110 = sphi 0, %s108
    %s111 = sphi 0, %s110
    %s125 = sphi 0, %s111
    %s131 = sphi 0, %s133
    %s134 = sphi 0, %s131
    %s135 = sphi 0, %s134
    %s151 = sphi 0, %s135
  $region4: #{basic_block_forward.1} parent=0 // loop_header_branch
    %14 = sbr.rel (%p12) target = $region8
  $region5: #{basic_block_forward.1} parent=0 // loop_body
    %s16 = ssub.s32 %s11, 1
    %s17 = ssub.s32 %s11, 2
    %s18 = sadd.s32 %s11, 1
    %s19 = ssub.s32 %s11, %s18
    %p20 = scmp.eq.s32.totalorder %s19, 0
    %s22 = sadd.s32 %s21, 1
    %s23 = scalar_select %p20, %s21, %s22
    %p26 = pneg %p20
    %p27 = scmp.eq.s32.totalorder %s11, 1
    %p28 = por %p26, %p27
    %p29 = scmp.ne.s32.totalorder %s21, %s24
    %p30 = scmp.eq.s32.totalorder %s11, 0
    %p31 = por %p29, %p30
    %p32 = scmp.ne.s32.totalorder %s21, %s24
    %p33 = scmp.eq.s32.totalorder %s16, 1
    %p34 = por %p32, %p33
    %p35 = scmp.ne.s32.totalorder %s24, %s25
    %p36 = scmp.eq.s32.totalorder %s16, 0
    %p37 = por %p35, %p36
    %p38 = scmp.ne.s32.totalorder %s24, %s25
    %p39 = scmp.eq.s32.totalorder %s17, 1
    %p40 = por %p38, %p39
    %p42 = scmp.ne.s32.totalorder %s25, %s41
    %p43 = scmp.eq.s32.totalorder %s17, 0
    %p44 = por %p42, %p43
    %s46 = sadd.s32 %s45, 1
    %p49 = scmp.eq.s32.totalorder %s11, 1
    %p50 = scmp.ne.s32.totalorder %s45, %s47
    %p51 = scmp.eq.s32.totalorder %s11, 0
    %p52 = por %p50, %p51
    %p53 = scmp.ne.s32.totalorder %s45, %s47
    %p54 = scmp.eq.s32.totalorder %s16, 1
    %p55 = por %p53, %p54
    %p56 = scmp.ne.s32.totalorder %s47, %s48
    %p57 = scmp.eq.s32.totalorder %s16, 0
    %p58 = por %p56, %p57
    %p59 = scmp.ne.s32.totalorder %s47, %s48
    %p60 = scmp.eq.s32.totalorder %s17, 1
    %p61 = por %p59, %p60
    %p63 = scmp.ne.s32.totalorder %s48, %s62
    %p64 = scmp.eq.s32.totalorder %s17, 0
    %p65 = por %p63, %p64
    %s67 = sadd.s32 %s66, 1
    %p70 = scmp.eq.s32.totalorder %s11, 1
    %p71 = scmp.ne.s32.totalorder %s66, %s68
    %p72 = scmp.eq.s32.totalorder %s11, 0
    %p73 = por %p71, %p72
    %p74 = scmp.ne.s32.totalorder %s66, %s68
    %p75 = scmp.eq.s32.totalorder %s16, 1
    %p76 = por %p74, %p75
    %p77 = scmp.ne.s32.totalorder %s68, %s69
    %p78 = scmp.eq.s32.totalorder %s16, 0
    %p79 = por %p77, %p78
    %p80 = scmp.ne.s32.totalorder %s68, %s69
    %p81 = scmp.eq.s32.totalorder %s17, 1
    %p82 = por %p80, %p81
    %p84 = scmp.ne.s32.totalorder %s69, %s83
    %p85 = scmp.eq.s32.totalorder %s17, 0
    %p86 = por %p84, %p85
    %s88 = sadd.s32 %s87, 1
    %p91 = scmp.eq.s32.totalorder %s11, 1
    %p92 = scmp.ne.s32.totalorder %s87, %s89
    %p93 = scmp.eq.s32.totalorder %s11, 0
    %p94 = por %p92, %p93
    %p95 = scmp.ne.s32.totalorder %s87, %s89
    %p96 = scmp.eq.s32.totalorder %s16, 1
    %p97 = por %p95, %p96
    %p98 = scmp.ne.s32.totalorder %s89, %s90
    %p99 = scmp.eq.s32.totalorder %s16, 0
    %p100 = por %p98, %p99
    %p101 = scmp.ne.s32.totalorder %s89, %s90
    %p102 = scmp.eq.s32.totalorder %s17, 1
    %p103 = por %p101, %p102
    %p105 = scmp.ne.s32.totalorder %s90, %s104
    %p106 = scmp.eq.s32.totalorder %s17, 0
    %p107 = por %p105, %p106
    %s109 = sadd.s32 %s108, 1
    %p112 = scmp.eq.s32.totalorder %s11, 1
    %p113 = scmp.ne.s32.totalorder %s108, %s110
    %p114 = scmp.eq.s32.totalorder %s11, 0
    %p115 = por %p113, %p114
    %p116 = scmp.ne.s32.totalorder %s108, %s110
    %p117 = scmp.eq.s32.totalorder %s16, 1
    %p118 = por %p116, %p117
    %p119 = scmp.ne.s32.totalorder %s110, %s111
    %p120 = scmp.eq.s32.totalorder %s16, 0
    %p121 = por %p119, %p120
    %p122 = scmp.ne.s32.totalorder %s110, %s111
    %p123 = scmp.eq.s32.totalorder %s17, 1
    %p124 = por %p122, %p123
    %p126 = scmp.ne.s32.totalorder %s111, %s125
    %p127 = scmp.eq.s32.totalorder %s17, 0
    %p128 = por %p126, %p127
    %s129 = ssub.s32 %s11, %s18
    %p130 = scmp.eq.s32.totalorder %s129, 0
    %s132 = sadd.s32 %s131, 1
    %s133 = scalar_select %p130, %s131, %s132
    %p136 = pneg %p130
    %p137 = scmp.eq.s32.totalorder %s11, 1
    %p138 = por %p136, %p137
    %p139 = scmp.ne.s32.totalorder %s131, %s134
    %p140 = scmp.eq.s32.totalorder %s11, 0
    %p141 = por %p139, %p140
    %p142 = scmp.ne.s32.totalorder %s131, %s134
    %p143 = scmp.eq.s32.totalorder %s16, 1
    %p144 = por %p142, %p143
    %p145 = scmp.ne.s32.totalorder %s134, %s135
    %p146 = scmp.eq.s32.totalorder %s16, 0
    %p147 = por %p145, %p146
    %p148 = scmp.ne.s32.totalorder %s134, %s135
    %p149 = scmp.eq.s32.totalorder %s17, 1
    %p150 = por %p148, %p149
    %p152 = scmp.ne.s32.totalorder %s135, %s151
    %p153 = scmp.eq.s32.totalorder %s17, 0
    %p154 = por %p152, %p153
    %p155 = scmp.le.s32.totalorder 1, %s11
    %p156 = scmp.lt.s32.totalorder %s11, 3
    %p157 = pnand %p155, %p156
    %p158 = pneg %p157
    // Predicated region
    $region9: #{basic_block_forward.1} parent=5 // pred_check
      _
    $region10: #{basic_block_forward.1} parent=5 // pred_check_branch
      %160 = sbr.rel (%p157) target = $region12
    $region11: #{basic_block_forward.1} parent=5 // pred_region
      %s161 = ssub.s32 %s11, 1
      // Predicated region
      $region13: #{basic_block_forward.1} parent=11 // pred_check
        %p162 = pneg %p58
      $region14: #{basic_block_forward.1} parent=11 // pred_check_branch
        %164 = sbr.rel (%p162) target = $region16
      $region15: #{basic_block_forward.1} parent=11 // pred_region
        _
      $region16: #{basic_block_forward.1} parent=11 // pred_fallthru
        _
      // Predicated region
      $region17: #{basic_block_forward.1} parent=11 // pred_check
        %p165 = pneg %p79
      $region18: #{basic_block_forward.1} parent=11 // pred_check_branch
        %167 = sbr.rel (%p165) target = $region20
      $region19: #{basic_block_forward.1} parent=11 // pred_region
        _
      $region20: #{basic_block_forward.1} parent=11 // pred_fallthru
        _
      // Predicated region
      $region21: #{basic_block_forward.1} parent=11 // pred_check
        %p168 = pneg %p100
      $region22: #{basic_block_forward.1} parent=11 // pred_check_branch
        %170 = sbr.rel (%p168) target = $region24
      $region23: #{basic_block_forward.1} parent=11 // pred_region
        _
      $region24: #{basic_block_forward.1} parent=11 // pred_fallthru
        _
      // Predicated region
      $region25: #{basic_block_forward.1} parent=11 // pred_check
        %p171 = pneg %p121
      $region26: #{basic_block_forward.1} parent=11 // pred_check_branch
        %173 = sbr.rel (%p171) target = $region28
      $region27: #{basic_block_forward.1} parent=11 // pred_region
        _
      $region28: #{basic_block_forward.1} parent=11 // pred_fallthru
        _
    $region12: #{basic_block_forward.1} parent=5 // pred_fallthru
      _
    %p174 = scmp.lt.s32.totalorder %s11, 2
    // Predicated region
    $region29: #{basic_block_forward.1} parent=5 // pred_check
      %p175 = pneg %p174
    $region30: #{basic_block_forward.1} parent=5 // pred_check_branch
      %177 = sbr.rel (%p175) target = $region32
    $region31: #{basic_block_forward.1} parent=5 // pred_region
      // Predicated region
      $region33: #{basic_block_forward.1} parent=31 // pred_check
        %p178 = pneg %p31
      $region34: #{basic_block_forward.1} parent=31 // pred_check_branch
        %180 = sbr.rel (%p178) target = $region36
      $region35: #{basic_block_forward.1} parent=31 // pred_region
        %p181 = scmp.lt.s32.totalorder %s11, 1
        %s182 = scalar_select %p181, %s11, 1
        %s183 = smul.addr %s182, 2
        %s184 = smul.addr %s183, 8
        %s185 = scalar_lea.vmem %s0, %s184
      $region36: #{basic_block_forward.1} parent=31 // pred_fallthru
        _
    $region32: #{basic_block_forward.1} parent=5 // pred_fallthru
      _
    %p186 = scmp.le.s32.totalorder 1, %s11
    %p187 = scmp.lt.s32.totalorder %s11, 3
    %p188 = pnand %p186, %p187
    %p189 = pneg %p188
    // Predicated region
    $region37: #{basic_block_forward.1} parent=5 // pred_check
      _
    $region38: #{basic_block_forward.1} parent=5 // pred_check_branch
      %191 = sbr.rel (%p188) target = $region40
    $region39: #{basic_block_forward.1} parent=5 // pred_region
      %s192 = ssub.s32 %s11, 1
      %p193 = scmp.lt.s32.totalorder %s16, 1
      %s194 = scalar_select %p193, %s16, 1
      %s195 = smul.addr %s194, 2
      %s196 = smul.addr %s195, 8
      %s197 = scalar_lea.vmem %s0, %s196
      %p198 = pneg %p37
      %p199 = pneg %p34
      %p200 = pneg %p58
      %p201 = pneg %p55
      %p202 = pneg %p79
      %p203 = pneg %p76
      %p204 = pneg %p100
      %p205 = pneg %p97
      %p206 = pneg %p121
      %p207 = pneg %p118
      %p208 = pneg %p147
      %p209 = pneg %p144
      %p210 = scmp.lt.s32.totalorder %s16, 1
      %s211 = scalar_select %p210, %s16, 1
      %s212 = smul.addr %s211, 2
      %s213 = smul.addr %s212, 8
      %s214 = scalar_lea.vmem %s5, %s213
      %p215 = scmp.lt.s32.totalorder %s16, 1
      %s216 = scalar_select %p215, %s16, 1
      %s217 = smul.addr %s216, 2
      %s218 = smul.addr %s217, 8
      %s219 = scalar_lea.vmem %s0, %s218
      %p220 = scmp.lt.s32.totalorder %s16, 1
      %s221 = scalar_select %p220, %s16, 1
      %s222 = smul.addr %s221, 2
      %s223 = smul.addr %s222, 8
      %s224 = scalar_lea.vmem %s5, %s223
      %v225 = vld [vmem:[%s219] sm:$0xff]
      %v226 = vld [vmem:[%s219 + $0x8] sm:$0xff]
      %v227 = vlaneseq
      %v228 = vshrl.u32 %v227, 7
      %v229 = vadd.s32 %v228, 8
      %vm230 = vcmp.ge.s32.totalorder %v228, 1
      %vm231 = vcmp.ge.s32.totalorder %v229, 1
      %v232 = vrot.slane %v225, 7
      %v233 = vrot.slane %v226, 7
      %vm234 = vcmp.lt.s32.totalorder %v228, 1
      %v235 = vsel %vm234, %v232, %v233
      %v236 = vsel %vm234, %v233, %v232
      %v237 = vsel %vm230, %v236, 0.0
      %v238 = vsel %vm231, %v235, 0.0
      %vm239 = vcmp.le.s32.totalorder %v228, 14
      %vm240 = vcmp.le.s32.totalorder %v229, 14
      %v241 = vrot.slane %v225, 1
      %v242 = vrot.slane %v226, 1
      %vm243 = vcmp.lt.s32.totalorder %v228, 7
      %v244 = vsel %vm243, %v241, %v242
      %v245 = vsel %vm243, %v242, %v241
      %v246 = vsel %vm239, %v244, 0.0
      %v247 = vsel %vm240, %v245, 0.0
      %v248 = vpack.c.bf16 %v238, %v237
      %v249 = vpack.c.bf16 %v226, %v225
      %v250 = vpack.c.bf16 %v247, %v246
      %v251 = vld [vmem:[%s2] sm:$0x1]
      %v252 = vld [vmem:[%s1] sm:$0xf]
      %v253 = vld [vmem:[%s1 + $0x4] sm:$0xf]
      %v254 = vld [vmem:[%s1 + $0x8] sm:$0xf]
      %v255 = vld [vmem:[%s1 + $0xc] sm:$0xf]
      %v256 = vld [vmem:[%s1 + $0x10] sm:$0xf]
      %v257 = vld [vmem:[%s1 + $0x14] sm:$0xf]
      %v258 = vld [vmem:[%s1 + $0x18] sm:$0xf]
      %v259 = vld [vmem:[%s1 + $0x1c] sm:$0xf]
      %v260 = vld [vmem:[%s1 + $0x20] sm:$0xf]
      %v261 = vld [vmem:[%s1 + $0x24] sm:$0xf]
      %v262 = vld [vmem:[%s1 + $0x28] sm:$0xf]
      %v263 = vld [vmem:[%s1 + $0x2c] sm:$0xf]
      %v264 = vld [vmem:[%s1 + $0x30] sm:$0xf]
      %v265 = vld [vmem:[%s1 + $0x34] sm:$0xf]
      %v266 = vld [vmem:[%s1 + $0x38] sm:$0xf]
      %v267 = vld [vmem:[%s1 + $0x3c] sm:$0xf]
      %v268 = vld [vmem:[%s1 + $0x40] sm:$0xf]
      %v269 = vld [vmem:[%s1 + $0x44] sm:$0xf]
      %v270 = vld [vmem:[%s1 + $0x48] sm:$0xf]
      %v271 = vld [vmem:[%s1 + $0x4c] sm:$0xf]
      %v272 = vld [vmem:[%s1 + $0x50] sm:$0xf]
      %v273 = vld [vmem:[%s1 + $0x54] sm:$0xf]
      %v274 = vld [vmem:[%s1 + $0x58] sm:$0xf]
      %v275 = vld [vmem:[%s1 + $0x5c] sm:$0xf]
      %v276 = vld [vmem:[%s1 + $0x60] sm:$0xf]
      %v277 = vld [vmem:[%s1 + $0x64] sm:$0xf]
      %v278 = vld [vmem:[%s1 + $0x68] sm:$0xf]
      %v279 = vld [vmem:[%s1 + $0x6c] sm:$0xf]
      %v280 = vld [vmem:[%s1 + $0x70] sm:$0xf]
      %v281 = vld [vmem:[%s1 + $0x74] sm:$0xf]
      %v282 = vld [vmem:[%s1 + $0x78] sm:$0xf]
      %v283 = vld [vmem:[%s1 + $0x7c] sm:$0xf]
      %v284 = vld [vmem:[%s1 + $0x80] sm:$0xf]
      %v285 = vld [vmem:[%s1 + $0x84] sm:$0xf]
      %v286 = vld [vmem:[%s1 + $0x88] sm:$0xf]
      %v287 = vld [vmem:[%s1 + $0x8c] sm:$0xf]
      %v288 = vld [vmem:[%s1 + $0x90] sm:$0xf]
      %v289 = vld [vmem:[%s1 + $0x94] sm:$0xf]
      %v290 = vld [vmem:[%s1 + $0x98] sm:$0xf]
      %v291 = vld [vmem:[%s1 + $0x9c] sm:$0xf]
      %v292 = vld [vmem:[%s1 + $0xa0] sm:$0xf]
      %v293 = vld [vmem:[%s1 + $0xa4] sm:$0xf]
      %v294 = vld [vmem:[%s1 + $0xa8] sm:$0xf]
      %v295 = vld [vmem:[%s1 + $0xac] sm:$0xf]
      %v296 = vld [vmem:[%s1 + $0xb0] sm:$0xf]
      %v297 = vld [vmem:[%s1 + $0xb4] sm:$0xf]
      %v298 = vld [vmem:[%s1 + $0xb8] sm:$0xf]
      %v299 = vld [vmem:[%s1 + $0xbc] sm:$0xf]
      %v348 = vunpack.c.l.b16 %v252
      %v349 = vunpack.c.l.b16 %v253
      %v350 = vunpack.c.l.b16 %v254
      %v351 = vunpack.c.l.b16 %v255
      %v352 = vunpack.c.l.b16 %v256
      %v353 = vunpack.c.l.b16 %v257
      %v354 = vunpack.c.l.b16 %v258
      %v355 = vunpack.c.l.b16 %v259
      %v356 = vunpack.c.l.b16 %v260
      %v357 = vunpack.c.l.b16 %v261
      %v358 = vunpack.c.l.b16 %v262
      %v359 = vunpack.c.l.b16 %v263
      %v360 = vunpack.c.l.b16 %v264
      %v361 = vunpack.c.l.b16 %v265
      %v362 = vunpack.c.l.b16 %v266
      %v363 = vunpack.c.l.b16 %v267
      %v364 = vunpack.c.l.b16 %v268
      %v365 = vunpack.c.l.b16 %v269
      %v366 = vunpack.c.l.b16 %v270
      %v367 = vunpack.c.l.b16 %v271
      %v368 = vunpack.c.l.b16 %v272
      %v369 = vunpack.c.l.b16 %v273
      %v370 = vunpack.c.l.b16 %v274
      %v371 = vunpack.c.l.b16 %v275
      %v372 = vunpack.c.l.b16 %v276
      %v373 = vunpack.c.l.b16 %v277
      %v374 = vunpack.c.l.b16 %v278
      %v375 = vunpack.c.l.b16 %v279
      %v376 = vunpack.c.l.b16 %v280
      %v377 = vunpack.c.l.b16 %v281
      %v378 = vunpack.c.l.b16 %v282
      %v379 = vunpack.c.l.b16 %v283
      %v380 = vunpack.c.l.b16 %v284
      %v381 = vunpack.c.l.b16 %v285
      %v382 = vunpack.c.l.b16 %v286
      %v383 = vunpack.c.l.b16 %v287
      %v384 = vunpack.c.l.b16 %v288
      %v385 = vunpack.c.l.b16 %v289
      %v386 = vunpack.c.l.b16 %v290
      %v387 = vunpack.c.l.b16 %v291
      %v388 = vunpack.c.l.b16 %v292
      %v389 = vunpack.c.l.b16 %v293
      %v390 = vunpack.c.l.b16 %v294
      %v391 = vunpack.c.l.b16 %v295
      %v392 = vunpack.c.l.b16 %v296
      %v393 = vunpack.c.l.b16 %v297
      %v394 = vunpack.c.l.b16 %v298
      %v395 = vunpack.c.l.b16 %v299
      %v396 = vpack.c.b16 %v349, %v348
      %v397 = vpack.c.b16 %v351, %v350
      %v398 = vpack.c.b16 %v353, %v352
      %v399 = vpack.c.b16 %v355, %v354
      %v400 = vpack.c.b16 %v357, %v356
      %v401 = vpack.c.b16 %v359, %v358
      %v402 = vpack.c.b16 %v361, %v360
      %v403 = vpack.c.b16 %v363, %v362
      %v404 = vpack.c.b16 %v365, %v364
      %v405 = vpack.c.b16 %v367, %v366
      %v406 = vpack.c.b16 %v369, %v368
      %v407 = vpack.c.b16 %v371, %v370
      %v408 = vpack.c.b16 %v373, %v372
      %v409 = vpack.c.b16 %v375, %v374
      %v410 = vpack.c.b16 %v377, %v376
      %v411 = vpack.c.b16 %v379, %v378
      %v412 = vpack.c.b16 %v381, %v380
      %v413 = vpack.c.b16 %v383, %v382
      %v414 = vpack.c.b16 %v385, %v384
      %v415 = vpack.c.b16 %v387, %v386
      %v416 = vpack.c.b16 %v389, %v388
      %v417 = vpack.c.b16 %v391, %v390
      %v418 = vpack.c.b16 %v393, %v392
      %v419 = vpack.c.b16 %v395, %v394
      %444 = vmatpush.bf16.msra.mxu0 %v403
      %445 = vmatpush.bf16.msra.mxu0 %v402
      %446 = vmatpush.bf16.msra.mxu0 %v401
      %447 = vmatpush.bf16.msra.mxu0 %v400
      %448 = vmatpush.bf16.msra.mxu0 %v399
      %449 = vmatpush.bf16.msra.mxu0 %v398
      %450 = vmatpush.bf16.msra.mxu0 %v397
      %451 = vmatpush.bf16.msra.mxu0 %v396
      %452 = vmatmul.bf16.gmra.mxu0 %v248
      %v453 = vpop.f32.mrf.mxu0
      %v454 = vadd.f32 0.0, %v453
      %v455 = vpop.f32.mrf.mxu0
      %v456 = vadd.f32 0.0, %v455
      %457 = vdwg.mxu0
      %458 = vmatpush.bf16.msra.mxu0 %v411
      %459 = vmatpush.bf16.msra.mxu0 %v410
      %460 = vmatpush.bf16.msra.mxu0 %v409
      %461 = vmatpush.bf16.msra.mxu0 %v408
      %462 = vmatpush.bf16.msra.mxu0 %v407
      %463 = vmatpush.bf16.msra.mxu0 %v406
      %464 = vmatpush.bf16.msra.mxu0 %v405
      %465 = vmatpush.bf16.msra.mxu0 %v404
      %466 = vmatmul.bf16.gmra.mxu0 %v249
      %v467 = vpop.f32.mrf.mxu0
      %v468 = vadd.f32 %v454, %v467
      %v469 = vpop.f32.mrf.mxu0
      %v470 = vadd.f32 %v456, %v469
      %471 = vdwg.mxu0
      %472 = vmatpush.bf16.msra.mxu0 %v419
      %473 = vmatpush.bf16.msra.mxu0 %v418
      %474 = vmatpush.bf16.msra.mxu0 %v417
      %475 = vmatpush.bf16.msra.mxu0 %v416
      %476 = vmatpush.bf16.msra.mxu0 %v415
      %477 = vmatpush.bf16.msra.mxu0 %v414
      %478 = vmatpush.bf16.msra.mxu0 %v413
      %479 = vmatpush.bf16.msra.mxu0 %v412
      %480 = vmatmul.bf16.gmra.mxu0 %v250
      %v481 = vpop.f32.mrf.mxu0
      %v482 = vadd.f32 %v468, %v481
      %v483 = vpop.f32.mrf.mxu0
      %v484 = vadd.f32 %v470, %v483
      %485 = vdwg.mxu0
      %v487 = vperm.slane %v251, 0
      %v489 = vadd.f32 %v487, %v482
      %v490 = vadd.f32 %v487, %v484
      %v491 = vmax.f32 %v489, 0.0
      %v492 = vmax.f32 %v490, 0.0
      %v493 = vrot.slane %v491, 7
      %v494 = vrot.slane %v492, 7
      %v495 = vsel %vm234, %v493, %v494
      %v496 = vsel %vm234, %v494, %v493
      %v497 = vsel %vm230, %v496, 0.0
      %v498 = vsel %vm231, %v495, 0.0
      %v499 = vrot.slane %v491, 1
      %v500 = vrot.slane %v492, 1
      %v501 = vsel %vm243, %v499, %v500
      %v502 = vsel %vm243, %v500, %v499
      %v503 = vsel %vm239, %v501, 0.0
      %v504 = vsel %vm240, %v502, 0.0
      %v505 = vpack.c.bf16 %v498, %v497
      %v506 = vpack.c.bf16 %v492, %v491
      %v507 = vpack.c.bf16 %v504, %v503
      %v508 = vld [vmem:[%s4] sm:$0x1]
      %v509 = vld [vmem:[%s3] sm:$0xf]
      %v510 = vld [vmem:[%s3 + $0x4] sm:$0xf]
      %v511 = vld [vmem:[%s3 + $0x8] sm:$0xf]
      %v512 = vld [vmem:[%s3 + $0xc] sm:$0xf]
      %v513 = vld [vmem:[%s3 + $0x10] sm:$0xf]
      %v514 = vld [vmem:[%s3 + $0x14] sm:$0xf]
      %v515 = vld [vmem:[%s3 + $0x18] sm:$0xf]
      %v516 = vld [vmem:[%s3 + $0x1c] sm:$0xf]
      %v517 = vld [vmem:[%s3 + $0x20] sm:$0xf]
      %v518 = vld [vmem:[%s3 + $0x24] sm:$0xf]
      %v519 = vld [vmem:[%s3 + $0x28] sm:$0xf]
      %v520 = vld [vmem:[%s3 + $0x2c] sm:$0xf]
      %v521 = vld [vmem:[%s3 + $0x30] sm:$0xf]
      %v522 = vld [vmem:[%s3 + $0x34] sm:$0xf]
      %v523 = vld [vmem:[%s3 + $0x38] sm:$0xf]
      %v524 = vld [vmem:[%s3 + $0x3c] sm:$0xf]
      %v525 = vld [vmem:[%s3 + $0x40] sm:$0xf]
      %v526 = vld [vmem:[%s3 + $0x44] sm:$0xf]
      %v527 = vld [vmem:[%s3 + $0x48] sm:$0xf]
      %v528 = vld [vmem:[%s3 + $0x4c] sm:$0xf]
      %v529 = vld [vmem:[%s3 + $0x50] sm:$0xf]
      %v530 = vld [vmem:[%s3 + $0x54] sm:$0xf]
      %v531 = vld [vmem:[%s3 + $0x58] sm:$0xf]
      %v532 = vld [vmem:[%s3 + $0x5c] sm:$0xf]
      %v533 = vld [vmem:[%s3 + $0x60] sm:$0xf]
      %v534 = vld [vmem:[%s3 + $0x64] sm:$0xf]
      %v535 = vld [vmem:[%s3 + $0x68] sm:$0xf]
      %v536 = vld [vmem:[%s3 + $0x6c] sm:$0xf]
      %v537 = vld [vmem:[%s3 + $0x70] sm:$0xf]
      %v538 = vld [vmem:[%s3 + $0x74] sm:$0xf]
      %v539 = vld [vmem:[%s3 + $0x78] sm:$0xf]
      %v540 = vld [vmem:[%s3 + $0x7c] sm:$0xf]
      %v541 = vld [vmem:[%s3 + $0x80] sm:$0xf]
      %v542 = vld [vmem:[%s3 + $0x84] sm:$0xf]
      %v543 = vld [vmem:[%s3 + $0x88] sm:$0xf]
      %v544 = vld [vmem:[%s3 + $0x8c] sm:$0xf]
      %v545 = vld [vmem:[%s3 + $0x90] sm:$0xf]
      %v546 = vld [vmem:[%s3 + $0x94] sm:$0xf]
      %v547 = vld [vmem:[%s3 + $0x98] sm:$0xf]
      %v548 = vld [vmem:[%s3 + $0x9c] sm:$0xf]
      %v549 = vld [vmem:[%s3 + $0xa0] sm:$0xf]
      %v550 = vld [vmem:[%s3 + $0xa4] sm:$0xf]
      %v551 = vld [vmem:[%s3 + $0xa8] sm:$0xf]
      %v552 = vld [vmem:[%s3 + $0xac] sm:$0xf]
      %v553 = vld [vmem:[%s3 + $0xb0] sm:$0xf]
      %v554 = vld [vmem:[%s3 + $0xb4] sm:$0xf]
      %v555 = vld [vmem:[%s3 + $0xb8] sm:$0xf]
      %v556 = vld [vmem:[%s3 + $0xbc] sm:$0xf]
      %v605 = vunpack.c.l.b16 %v509
      %v606 = vunpack.c.l.b16 %v510
      %v607 = vunpack.c.l.b16 %v511
      %v608 = vunpack.c.l.b16 %v512
      %v609 = vunpack.c.l.b16 %v513
      %v610 = vunpack.c.l.b16 %v514
      %v611 = vunpack.c.l.b16 %v515
      %v612 = vunpack.c.l.b16 %v516
      %v613 = vunpack.c.l.b16 %v517
      %v614 = vunpack.c.l.b16 %v518
      %v615 = vunpack.c.l.b16 %v519
      %v616 = vunpack.c.l.b16 %v520
      %v617 = vunpack.c.l.b16 %v521
      %v618 = vunpack.c.l.b16 %v522
      %v619 = vunpack.c.l.b16 %v523
      %v620 = vunpack.c.l.b16 %v524
      %v621 = vunpack.c.l.b16 %v525
      %v622 = vunpack.c.l.b16 %v526
      %v623 = vunpack.c.l.b16 %v527
      %v624 = vunpack.c.l.b16 %v528
      %v625 = vunpack.c.l.b16 %v529
      %v626 = vunpack.c.l.b16 %v530
      %v627 = vunpack.c.l.b16 %v531
      %v628 = vunpack.c.l.b16 %v532
      %v629 = vunpack.c.l.b16 %v533
      %v630 = vunpack.c.l.b16 %v534
      %v631 = vunpack.c.l.b16 %v535
      %v632 = vunpack.c.l.b16 %v536
      %v633 = vunpack.c.l.b16 %v537
      %v634 = vunpack.c.l.b16 %v538
      %v635 = vunpack.c.l.b16 %v539
      %v636 = vunpack.c.l.b16 %v540
      %v637 = vunpack.c.l.b16 %v541
      %v638 = vunpack.c.l.b16 %v542
      %v639 = vunpack.c.l.b16 %v543
      %v640 = vunpack.c.l.b16 %v544
      %v641 = vunpack.c.l.b16 %v545
      %v642 = vunpack.c.l.b16 %v546
      %v643 = vunpack.c.l.b16 %v547
      %v644 = vunpack.c.l.b16 %v548
      %v645 = vunpack.c.l.b16 %v549
      %v646 = vunpack.c.l.b16 %v550
      %v647 = vunpack.c.l.b16 %v551
      %v648 = vunpack.c.l.b16 %v552
      %v649 = vunpack.c.l.b16 %v553
      %v650 = vunpack.c.l.b16 %v554
      %v651 = vunpack.c.l.b16 %v555
      %v652 = vunpack.c.l.b16 %v556
      %v653 = vpack.c.b16 %v606, %v605
      %v654 = vpack.c.b16 %v608, %v607
      %v655 = vpack.c.b16 %v610, %v609
      %v656 = vpack.c.b16 %v612, %v611
      %v657 = vpack.c.b16 %v614, %v613
      %v658 = vpack.c.b16 %v616, %v615
      %v659 = vpack.c.b16 %v618, %v617
      %v660 = vpack.c.b16 %v620, %v619
      %v661 = vpack.c.b16 %v622, %v621
      %v662 = vpack.c.b16 %v624, %v623
      %v663 = vpack.c.b16 %v626, %v625
      %v664 = vpack.c.b16 %v628, %v627
      %v665 = vpack.c.b16 %v630, %v629
      %v666 = vpack.c.b16 %v632, %v631
      %v667 = vpack.c.b16 %v634, %v633
      %v668 = vpack.c.b16 %v636, %v635
      %v669 = vpack.c.b16 %v638, %v637
      %v670 = vpack.c.b16 %v640, %v639
      %v671 = vpack.c.b16 %v642, %v641
      %v672 = vpack.c.b16 %v644, %v643
      %v673 = vpack.c.b16 %v646, %v645
      %v674 = vpack.c.b16 %v648, %v647
      %v675 = vpack.c.b16 %v650, %v649
      %v676 = vpack.c.b16 %v652, %v651
      %701 = vmatpush.bf16.msra.mxu0 %v660
      %702 = vmatpush.bf16.msra.mxu0 %v659
      %703 = vmatpush.bf16.msra.mxu0 %v658
      %704 = vmatpush.bf16.msra.mxu0 %v657
      %705 = vmatpush.bf16.msra.mxu0 %v656
      %706 = vmatpush.bf16.msra.mxu0 %v655
      %707 = vmatpush.bf16.msra.mxu0 %v654
      %708 = vmatpush.bf16.msra.mxu0 %v653
      %709 = vmatmul.bf16.gmra.mxu0 %v505
      %v710 = vpop.f32.mrf.mxu0
      %v711 = vadd.f32 0.0, %v710
      %v712 = vpop.f32.mrf.mxu0
      %v713 = vadd.f32 0.0, %v712
      %714 = vdwg.mxu0
      %715 = vmatpush.bf16.msra.mxu0 %v668
      %716 = vmatpush.bf16.msra.mxu0 %v667
      %717 = vmatpush.bf16.msra.mxu0 %v666
      %718 = vmatpush.bf16.msra.mxu0 %v665
      %719 = vmatpush.bf16.msra.mxu0 %v664
      %720 = vmatpush.bf16.msra.mxu0 %v663
      %721 = vmatpush.bf16.msra.mxu0 %v662
      %722 = vmatpush.bf16.msra.mxu0 %v661
      %723 = vmatmul.bf16.gmra.mxu0 %v506
      %v724 = vpop.f32.mrf.mxu0
      %v725 = vadd.f32 %v711, %v724
      %v726 = vpop.f32.mrf.mxu0
      %v727 = vadd.f32 %v713, %v726
      %728 = vdwg.mxu0
      %729 = vmatpush.bf16.msra.mxu0 %v676
      %730 = vmatpush.bf16.msra.mxu0 %v675
      %731 = vmatpush.bf16.msra.mxu0 %v674
      %732 = vmatpush.bf16.msra.mxu0 %v673
      %733 = vmatpush.bf16.msra.mxu0 %v672
      %734 = vmatpush.bf16.msra.mxu0 %v671
      %735 = vmatpush.bf16.msra.mxu0 %v670
      %736 = vmatpush.bf16.msra.mxu0 %v669
      %737 = vmatmul.bf16.gmra.mxu0 %v507
      %v738 = vpop.f32.mrf.mxu0
      %v739 = vadd.f32 %v725, %v738
      %v740 = vpop.f32.mrf.mxu0
      %v741 = vadd.f32 %v727, %v740
      %742 = vdwg.mxu0
      %v744 = vperm.slane %v508, 0
      %v746 = vadd.f32 %v744, %v739
      %v747 = vadd.f32 %v744, %v741
      %v748 = vadd.f32 %v746, %v225
      %v749 = vadd.f32 %v747, %v226
      %v750 = vmax.f32 %v748, 0.0
      %v751 = vmax.f32 %v749, 0.0
      %752 = vst [vmem:[%s224] sm:$0xff] %v750
      %753 = vst [vmem:[%s224 + $0x8] sm:$0xff] %v751
      %p754 = scmp.lt.s32.totalorder %s16, 1
      %s755 = scalar_select %p754, %s16, 1
      %s756 = smul.addr %s755, 2
      %s757 = smul.addr %s756, 8
      %s758 = scalar_lea.vmem %s5, %s757
      // Predicated region
      $region41: #{basic_block_forward.1} parent=39 // pred_check
        %p759 = pneg %p144
      $region42: #{basic_block_forward.1} parent=39 // pred_check_branch
        %761 = sbr.rel (%p759) target = $region44
      $region43: #{basic_block_forward.1} parent=39 // pred_region
        _
      $region44: #{basic_block_forward.1} parent=39 // pred_fallthru
        _
    $region40: #{basic_block_forward.1} parent=5 // pred_fallthru
      _
    %p762 = scmp.le.s32.totalorder 2, %s11
    // Predicated region
    $region45: #{basic_block_forward.1} parent=5 // pred_check
      %p763 = pneg %p762
    $region46: #{basic_block_forward.1} parent=5 // pred_check_branch
      %765 = sbr.rel (%p763) target = $region48
    $region47: #{basic_block_forward.1} parent=5 // pred_region
      %s766 = ssub.s32 %s11, 2
      // Predicated region
      $region49: #{basic_block_forward.1} parent=47 // pred_check
        %p767 = pneg %p150
      $region50: #{basic_block_forward.1} parent=47 // pred_check_branch
        %769 = sbr.rel (%p767) target = $region52
      $region51: #{basic_block_forward.1} parent=47 // pred_region
        %p770 = scmp.lt.s32.totalorder %s17, 1
        %s771 = scalar_select %p770, %s17, 1
        %s772 = smul.addr %s771, 2
        %s773 = smul.addr %s772, 8
        %s774 = scalar_lea.vmem %s5, %s773
      $region52: #{basic_block_forward.1} parent=47 // pred_fallthru
        _
    $region48: #{basic_block_forward.1} parent=5 // pred_fallthru
      _
  $region6: #{basic_block_forward.1} parent=0 // loop_footer
    %s15 = sadd.s32 1, %s11
  $region7: #{basic_block_forward.1} parent=0 // loop_footer_branch
    %10 = sbr.rel target = $region3
  $region8: #{basic_block_forward.1} parent=0 // loop_exit
    _

</llo_original>
